<compile_context>
chip_gen: v6e
topology: v6e:2x2x1
jax: 0.10.0
libtpu: 0.0.40
codegen_flags: <defaults>
</compile_context>

<pallas_src>
import math

import jax
import jax.numpy as jnp
from jax.experimental import pallas as pl
from jax.experimental.pallas import tpu as pltpu


# ----------------------------------------------------------------------------
# pe table: built once and cached (mirrors the PyTorch buffer registered in
# __init__ at max_len; forward only slices it).
# ----------------------------------------------------------------------------
_PE_CACHE = {}


def make_positional_encoding(max_len, d_model):
    """Sinusoidal pe table, identical to the PyTorch module's f32 buffer."""
    assert d_model % 2 == 0, "d_model must be even (as the PyTorch module assumes)"
    cache_key = (int(max_len), int(d_model))
    pe = _PE_CACHE.get(cache_key)
    if pe is None:
        position = jnp.arange(max_len, dtype=jnp.float32)[:, None]            # (L, 1)
        div_term = jnp.exp(jnp.arange(0, d_model, 2, dtype=jnp.float32)
                           * (-math.log(10000.0) / d_model))                  # (D/2,)
        pe = jnp.zeros((max_len, d_model), dtype=jnp.float32)
        pe = pe.at[:, 0::2].set(jnp.sin(position * div_term))
        pe = pe.at[:, 1::2].set(jnp.cos(position * div_term))
        _PE_CACHE[cache_key] = pe
    return pe


# ----------------------------------------------------------------------------
# Kernel: pure HBM-bound VPU add.  x/o blocks are (B, TS, D); pe block is
# (TS, D) f32 and broadcasts over the leading batch dim.
# ----------------------------------------------------------------------------
def _pe_add_kernel(x_ref, pe_ref, o_ref):
    o_ref[...] = (x_ref[...].astype(jnp.float32) + pe_ref[...]).astype(o_ref.dtype)


def _tpu_vmem_bytes():
    try:
        return int(pltpu.get_tpu_info().vmem_capacity_bytes)
    except Exception:
        return 64 * 1024 * 1024            # conservative default (v7x per-TC VMEM)


def _pick_rows(S, B, D, itemsize, target_block_bytes):
    """Sequence rows per block: native sublane multiple for the dtype, sized to
    the VMEM budget, and capped so the grid has >=4 steps (pipelining + v7x
    two-core sharding) whenever the tensor is big enough."""
    sub = 8 * max(1, 4 // itemsize)        # 8 (f32) / 16 (bf16) / 32 (int8, fp8)
    if S <= sub:
        return S                           # full second-to-last dim: always legal
    budget_rows = max(1, target_block_bytes // (B * D * itemsize))
    pipeline_rows = pl.cdiv(S, 4)
    rows = min(S, budget_rows, pipeline_rows)
    rows = max(sub, (rows // sub) * sub)   # round down to a native sublane tile
    return rows


def positional_encoding_add(x, pe=None, *, max_len=None,
                            target_block_bytes=None, in_place=False):
    """x: (B, S, D).  Returns x + pe[:S] (pe broadcast over batch)."""
    B, S, D = x.shape
    if pe is None:
        pe = make_positional_encoding(max_len if max_len is not None else S, D)
    if pe.ndim == 3:                       # accept a torch-style (1, L, D) buffer
        pe = pe[0]
    assert pe.shape[-1] == D and pe.shape[0] >= S
    pe = pe[:S].astype(jnp.float32)        # buffer stays f32; add is done in f32

    itemsize = jnp.dtype(x.dtype).itemsize
    vmem_cap = _tpu_vmem_bytes()
    if target_block_bytes is None:
        # ~VMEM/16 per x block: real footprint (double-buffered x in + out + pe)
        # is ~4x block, i.e. ~VMEM/4 — safe on v5e/v6e (128 MiB) and v7x (64 MiB).
        target_block_bytes = min(8 << 20, max(1 << 20, vmem_cap // 16))

    rows = _pick_rows(S, B, D, itemsize, target_block_bytes)
    grid = (pl.cdiv(S, rows),)             # ragged last block handled by Pallas

    x_block_bytes = B * rows * D * itemsize
    pe_block_bytes = rows * D * 4
    vmem_limit = max(32 << 20, 4 * x_block_bytes + 2 * pe_block_bytes + (1 << 20))
    vmem_limit = min(vmem_limit, (vmem_cap * 3) // 4)

    return pl.pallas_call(
        _pe_add_kernel,
        out_shape=jax.ShapeDtypeStruct((B, S, D), x.dtype),
        grid=grid,
        in_specs=[
            pl.BlockSpec((B, rows, D), lambda s: (0, s, 0)),   # x block
            pl.BlockSpec((rows, D), lambda s: (s, 0)),         # pe block (bcast over B)
        ],
        out_specs=pl.BlockSpec((B, rows, D), lambda s: (0, s, 0)),
        input_output_aliases=({0: 0} if in_place else {}),
        compiler_params=pltpu.CompilerParams(
            dimension_semantics=("parallel",),                 # v7x: shard across 2 TCs
            vmem_limit_bytes=int(vmem_limit)),
        cost_estimate=pl.CostEstimate(
            flops=B * S * D,
            transcendentals=0,
            bytes_accessed=2 * B * S * D * itemsize + S * D * 4),
    )(x, pe)


class PositionalEncoding:
    """Mirrors the PyTorch module: pe built once at max_len, forward adds a slice."""

    def __init__(self, d_model, max_len=5000):
        self.d_model = d_model
        self.pe = make_positional_encoding(max_len, d_model)   # (max_len, d_model) f32

    def __call__(self, x):
        return positional_encoding_add(x, self.pe)


def positional_encoding_ref(x, pe=None):
    """Pure-JAX reference matching the kernel (and the PyTorch formula)."""
    B, S, D = x.shape
    if pe is None:
        pe = make_positional_encoding(S, D)
    if pe.ndim == 3:
        pe = pe[0]
    return (x.astype(jnp.float32) + pe[:S][None].astype(jnp.float32)).astype(x.dtype)


if __name__ == "__main__":
    key = jax.random.PRNGKey(0)

    # Module-style usage: pe built once at max_len=128, sliced per forward.
    module = PositionalEncoding(d_model=64, max_len=128)

    cases = [
        ((2, 16, 64), jnp.float32),    # module path (f32, multi-step grid)
        ((2, 8, 32),  jnp.float32),    # d_model < 128 (full-dim lane block)
        ((2, 5, 24),  jnp.float32),    # small/odd S, D not multiple of 128
        ((2, 16, 64), jnp.bfloat16),   # bf16 activations, f32 pe accumulate
    ]
    for i, (shape, dtype) in enumerate(cases):
        key, sub = jax.random.split(key)
        x = jax.random.normal(sub, shape, dtype=dtype)
        if shape[2] == module.d_model:
            out = module(x)
            ref = positional_encoding_ref(x, module.pe)
        else:
            out = positional_encoding_add(x)
            ref = positional_encoding_ref(x)
        out = jax.block_until_ready(out)
        assert out.shape == ref.shape and out.dtype == ref.dtype, f"case {i} shape/dtype"
        tol = 1e-5 if dtype == jnp.float32 else 2e-2
        assert jnp.allclose(out.astype(jnp.float32), ref.astype(jnp.float32),
                            atol=tol, rtol=tol), f"case {i} mismatch"

    # Small block budget: exercises the multi-step cdiv grid with a ragged
    # last block (S=44 with 8-row blocks -> 6 grid steps, last block partial).
    key, sub = jax.random.split(key)
    x = jax.random.normal(sub, (2, 44, 64), dtype=jnp.float32)
    out = jax.block_until_ready(positional_encoding_add(x, target_block_bytes=4096))
    ref = positional_encoding_ref(x)
    assert jnp.allclose(out, ref, atol=1e-5, rtol=1e-5), "ragged-grid case mismatch"

    # In-place path: alias x into the output (donated under jit).
    key, sub = jax.random.split(key)
    x = jax.random.normal(sub, (2, 16, 64), dtype=jnp.float32)
    ref = positional_encoding_ref(x, module.pe)
    inplace_fn = jax.jit(lambda a, p: positional_encoding_add(a, p, in_place=True),
                         donate_argnums=(0,))
    out = jax.block_until_ready(inplace_fn(x, module.pe))
    assert jnp.allclose(out, ref, atol=1e-5, rtol=1e-5), "in-place case mismatch"

    print("KERNEL_OK")
</pallas_src>

<mosaic_0001>
module attributes {stable_mosaic.version = 11 : i64} {
  func.func @_pe_add_kernel(%arg0: i32, %arg1: memref<2x8x64xf32, #tpu.memory_space<vmem>>, %arg2: memref<8x64xf32, #tpu.memory_space<vmem>>, %arg3: memref<2x8x64xf32, #tpu.memory_space<vmem>>) attributes {dimension_semantics = [#tpu.dimension_semantics<parallel>], iteration_bounds = array<i64: 2>, scalar_prefetch = 0 : i64, scratch_operands = 0 : i64, tpu.core_type = #tpu.core_type<tc>, window_params = [{transform_indices = @transform_0, window_bounds = array<i64: 2, 8, 64>}, {transform_indices = @transform_1, window_bounds = array<i64: 8, 64>}, {transform_indices = @transform_2, window_bounds = array<i64: 2, 8, 64>}]} {
    %c0 = arith.constant 0 : index
    %c0_0 = arith.constant 0 : index
    %c0_1 = arith.constant 0 : index
    %0 = vector.load %arg1[%c0, %c0_0, %c0_1] : memref<2x8x64xf32, #tpu.memory_space<vmem>>, vector<2x8x64xf32>
    %c0_2 = arith.constant 0 : index
    %c0_3 = arith.constant 0 : index
    %1 = vector.load %arg2[%c0_2, %c0_3] : memref<8x64xf32, #tpu.memory_space<vmem>>, vector<8x64xf32>
    %2 = vector.shape_cast %1 : vector<8x64xf32> to vector<1x8x64xf32>
    %3 = vector.broadcast %2 : vector<1x8x64xf32> to vector<2x8x64xf32>
    %4 = arith.addf %0, %3 : vector<2x8x64xf32>
    %c0_4 = arith.constant 0 : index
    %c0_5 = arith.constant 0 : index
    %c0_6 = arith.constant 0 : index
    %5 = vector.load %arg3[%c0_4, %c0_5, %c0_6] : memref<2x8x64xf32, #tpu.memory_space<vmem>>, vector<2x8x64xf32>
    tpu.vector_store %arg3[%c0_4, %c0_5, %c0_6], %4 {strides = array<i32>} : memref<2x8x64xf32, #tpu.memory_space<vmem>>, vector<2x8x64xf32>,
    return
  }
  func.func @transform_0(%arg0: i32) -> (i32, i32, i32) {
    %c0_i32 = arith.constant 0 : i32
    %c0_i32_0 = arith.constant 0 : i32
    %c0_i32_1 = arith.constant 0 : i32
    return %c0_i32, %arg0, %c0_i32_0 : i32, i32, i32
  }
  func.func @transform_1(%arg0: i32) -> (i32, i32) {
    %c0_i32 = arith.constant 0 : i32
    %c0_i32_0 = arith.constant 0 : i32
    return %arg0, %c0_i32 : i32, i32
  }
  func.func @transform_2(%arg0: i32) -> (i32, i32, i32) {
    %c0_i32 = arith.constant 0 : i32
    %c0_i32_0 = arith.constant 0 : i32
    %c0_i32_1 = arith.constant 0 : i32
    return %c0_i32, %arg0, %c0_i32_0 : i32, i32, i32
  }
}

</mosaic_0001>

<llo_original>
// kernel: tpu_custom_call.1
$region0: #{tpu_custom_call.1}
  #allocation0 [shape = 'u32[]', space=smem, size = 0x4, offset = 0x4, fixed_abs, tag = 'smem constant byte address 0x4 - core index']
  #allocation1 [shape = 'u32[144,128]{1,0:T(1,128)}', space=vmem, size = 0x12000, scoped, tag = 'internal scratch']
  %s0 = inlined_call_operand.hbm [shape: f32[2,16,64], index: 0, kind: input, shape index: {}]
  %s1 = inlined_call_operand.hbm [shape: f32[16,64], index: 1, kind: input, shape index: {}]
  %s2 = inlined_call_operand.hbm [shape: f32[2,16,64], index: 2, kind: output, shape index: {}]
  %s3 = sld [smem:[#allocation0]]
  $region49: #{tpu_custom_call.1} parent=0
    _
  %s5 = ssub.s32 1, %s3
  %s6 = scalar_select 0, %s5, %s3
  $region1: #{tpu_custom_call.1} parent=0
    #allocation2 [shape = 'u8[16384]{0}', space=vmem, size = 0x4000, scoped, tag = 'input window, operand 0']
    #allocation3 [shape = 's32[2]{0}', space=sflag, size = 0x8, scoped, tag = 'scoped memory for tpu_custom_call.1']
    #allocation4 [shape = 's32[2]{0}', space=sflag, size = 0x8, scoped, tag = 'scoped memory for tpu_custom_call.1']
    #allocation5 [shape = 'u8[8192]{0}', space=vmem, size = 0x2000, scoped, tag = 'input window, operand 1']
    #allocation6 [shape = 's32[2]{0}', space=sflag, size = 0x8, scoped, tag = 'scoped memory for tpu_custom_call.1']
    #allocation7 [shape = 'u8[16384]{0}', space=vmem, size = 0x4000, scoped, tag = 'output window, operand 0']
    %7 = vsyncpa [#allocation3], 0
    %s8 = scalar_lea.sflag [#allocation3], 1
    %9 = vsyncpa %s8, 0
    %10 = vsyncpa [#allocation6], 0
    %s11 = scalar_lea.sflag [#allocation6], 1
    %12 = vsyncpa %s11, 0
    %13 = vsyncpa [#allocation4], 0
    %s14 = scalar_lea.sflag [#allocation4], 1
    %15 = vsyncpa %s14, 0
    loop: start=0, step=1, limit=4
    $region2: #{tpu_custom_call.1} parent=1 // loop_pre_header
      _
    $region3: #{tpu_custom_call.1} parent=1 // loop_header
      %s17 = sphi 0, %s21
      %p18 = scmp.ge.s32.totalorder %s17, 4
      %s27 = sphi 0, %s29
      %s30 = sphi 0, %s27
      %s31 = sphi 0, %s30
      %s47 = sphi 0, %s31
      %s53 = sphi 0, %s55
      %s56 = sphi 0, %s53
      %s57 = sphi 0, %s56
      %s73 = sphi 0, %s57
      %s79 = sphi 0, %s81
      %s82 = sphi 0, %s79
      %s83 = sphi 0, %s82
      %s99 = sphi 0, %s83
    $region4: #{tpu_custom_call.1} parent=1 // loop_header_branch
      %20 = sbr.rel (%p18) target = $region8
    $region5: #{tpu_custom_call.1} parent=1 // loop_body
      %s22 = ssub.s32 %s17, 1
      %s23 = ssub.s32 %s17, 2
      %s24 = sadd.s32 %s17, 1
      %s25 = ssub.s32 %s17, %s24
      %p26 = scmp.eq.s32.totalorder %s25, 0
      %s28 = sadd.s32 %s27, 1
      %s29 = scalar_select %p26, %s27, %s28
      %p32 = pneg %p26
      %p33 = scmp.eq.s32.totalorder %s17, 1
      %p34 = por %p32, %p33
      %p35 = scmp.ne.s32.totalorder %s27, %s30
      %p36 = scmp.eq.s32.totalorder %s17, 0
      %p37 = por %p35, %p36
      %p38 = scmp.ne.s32.totalorder %s27, %s30
      %p39 = scmp.eq.s32.totalorder %s22, 1
      %p40 = por %p38, %p39
      %p41 = scmp.ne.s32.totalorder %s30, %s31
      %p42 = scmp.eq.s32.totalorder %s22, 0
      %p43 = por %p41, %p42
      %p44 = scmp.ne.s32.totalorder %s30, %s31
      %p45 = scmp.eq.s32.totalorder %s23, 1
      %p46 = por %p44, %p45
      %p48 = scmp.ne.s32.totalorder %s31, %s47
      %p49 = scmp.eq.s32.totalorder %s23, 0
      %p50 = por %p48, %p49
      %s51 = ssub.s32 %s17, %s24
      %p52 = scmp.eq.s32.totalorder %s51, 0
      %s54 = sadd.s32 %s53, 1
      %s55 = scalar_select %p52, %s53, %s54
      %p58 = pneg %p52
      %p59 = scmp.eq.s32.totalorder %s17, 1
      %p60 = por %p58, %p59
      %p61 = scmp.ne.s32.totalorder %s53, %s56
      %p62 = scmp.eq.s32.totalorder %s17, 0
      %p63 = por %p61, %p62
      %p64 = scmp.ne.s32.totalorder %s53, %s56
      %p65 = scmp.eq.s32.totalorder %s22, 1
      %p66 = por %p64, %p65
      %p67 = scmp.ne.s32.totalorder %s56, %s57
      %p68 = scmp.eq.s32.totalorder %s22, 0
      %p69 = por %p67, %p68
      %p70 = scmp.ne.s32.totalorder %s56, %s57
      %p71 = scmp.eq.s32.totalorder %s23, 1
      %p72 = por %p70, %p71
      %p74 = scmp.ne.s32.totalorder %s57, %s73
      %p75 = scmp.eq.s32.totalorder %s23, 0
      %p76 = por %p74, %p75
      %s77 = ssub.s32 %s17, %s24
      %p78 = scmp.eq.s32.totalorder %s77, 0
      %s80 = sadd.s32 %s79, 1
      %s81 = scalar_select %p78, %s79, %s80
      %p84 = pneg %p78
      %p85 = scmp.eq.s32.totalorder %s17, 1
      %p86 = por %p84, %p85
      %p87 = scmp.ne.s32.totalorder %s79, %s82
      %p88 = scmp.eq.s32.totalorder %s17, 0
      %p89 = por %p87, %p88
      %p90 = scmp.ne.s32.totalorder %s79, %s82
      %p91 = scmp.eq.s32.totalorder %s22, 1
      %p92 = por %p90, %p91
      %p93 = scmp.ne.s32.totalorder %s82, %s83
      %p94 = scmp.eq.s32.totalorder %s22, 0
      %p95 = por %p93, %p94
      %p96 = scmp.ne.s32.totalorder %s82, %s83
      %p97 = scmp.eq.s32.totalorder %s23, 1
      %p98 = por %p96, %p97
      %p100 = scmp.ne.s32.totalorder %s83, %s99
      %p101 = scmp.eq.s32.totalorder %s23, 0
      %p102 = por %p100, %p101
      %p103 = scmp.le.s32.totalorder 1, %s17
      %p104 = scmp.lt.s32.totalorder %s17, 3
      %p105 = pnand %p103, %p104
      %p106 = pneg %p105
      // Predicated region
      $region9: #{tpu_custom_call.1} parent=5 // pred_check
        _
      $region10: #{tpu_custom_call.1} parent=5 // pred_check_branch
        %108 = sbr.rel (%p105) target = $region12
      $region11: #{tpu_custom_call.1} parent=5 // pred_region
        %s109 = ssub.s32 %s17, 1
      $region12: #{tpu_custom_call.1} parent=5 // pred_fallthru
        _
      %p110 = scmp.lt.s32.totalorder %s17, 2
      // Predicated region
      $region13: #{tpu_custom_call.1} parent=5 // pred_check
        %p111 = pneg %p110
      $region14: #{tpu_custom_call.1} parent=5 // pred_check_branch
        %113 = sbr.rel (%p111) target = $region16
      $region15: #{tpu_custom_call.1} parent=5 // pred_region
        // Predicated region
        $region17: #{tpu_custom_call.1} parent=15 // pred_check
          %p114 = pneg %p37
        $region18: #{tpu_custom_call.1} parent=15 // pred_check_branch
          %116 = sbr.rel (%p114) target = $region20
        $region19: #{tpu_custom_call.1} parent=15 // pred_region
          %s117 = sand.u32 %s27, 1
          %s118 = scalar_lea.sflag [#allocation3], %s117
          %s119 = sand.u32 %s27, 1
          %s120 = smul.addr %s119, 16
          %s121 = scalar_lea.vmem [#allocation2], %s120
          %s123 = ssub.s32 256, 256
          %124 = vsyncadd %s118, %s123
          %s125 = smul.addr %s17, 128
          %s126 = scalar_lea.hbm %s0, %s125
          %s127 = sshll.u32 %s121, 4
          %s128 = int_to_ptr.vmem [resolvable:$true] %s127
          %133 = dma.hbm_to_vmem [thread:$0]  %s126, 256, %s128, %s118, 256, 128, 8
        $region20: #{tpu_custom_call.1} parent=15 // pred_fallthru
          _
        // Predicated region
        $region21: #{tpu_custom_call.1} parent=15 // pred_check
          %p134 = pneg %p63
        $region22: #{tpu_custom_call.1} parent=15 // pred_check_branch
          %136 = sbr.rel (%p134) target = $region24
        $region23: #{tpu_custom_call.1} parent=15 // pred_region
          %s137 = sand.u32 %s53, 1
          %s138 = scalar_lea.sflag [#allocation6], %s137
          %s139 = sand.u32 %s53, 1
          %s140 = smul.addr %s139, 8
          %s141 = scalar_lea.vmem [#allocation5], %s140
          %s143 = ssub.s32 128, 128
          %144 = vsyncadd %s138, %s143
          %s145 = smul.addr %s17, 128
          %s146 = scalar_lea.hbm %s1, %s145
          %s148 = sshll.u32 %s141, 4
          %s149 = int_to_ptr.vmem [resolvable:$true] %s148
          %151 = dma.hbm_to_vmem [thread:$0]  %s146, 128, %s149, %s138
        $region24: #{tpu_custom_call.1} parent=15 // pred_fallthru
          _
      $region16: #{tpu_custom_call.1} parent=5 // pred_fallthru
        _
      %p152 = scmp.le.s32.totalorder 1, %s17
      %p153 = scmp.lt.s32.totalorder %s17, 3
      %p154 = pnand %p152, %p153
      %p155 = pneg %p154
      // Predicated region
      $region25: #{tpu_custom_call.1} parent=5 // pred_check
        _
      $region26: #{tpu_custom_call.1} parent=5 // pred_check_branch
        %157 = sbr.rel (%p154) target = $region28
      $region27: #{tpu_custom_call.1} parent=5 // pred_region
        %s158 = ssub.s32 %s17, 1
        %s159 = sand.u32 %s30, 1
        %s160 = scalar_lea.sflag [#allocation3], %s159
        %s161 = sand.u32 %s30, 1
        %s162 = smul.addr %s161, 16
        %s163 = scalar_lea.vmem [#allocation2], %s162
        // Predicated region
        $region29: #{tpu_custom_call.1} parent=27 // pred_check
          %p164 = pneg %p43
        $region30: #{tpu_custom_call.1} parent=27 // pred_check_branch
          %166 = sbr.rel (%p164) target = $region32
        $region31: #{tpu_custom_call.1} parent=27 // pred_region
          %167 = dma.done %s160, 256
        $region32: #{tpu_custom_call.1} parent=27 // pred_fallthru
          _
        %s168 = sand.u32 %s56, 1
        %s169 = scalar_lea.sflag [#allocation6], %s168
        %s170 = sand.u32 %s56, 1
        %s171 = smul.addr %s170, 8
        %s172 = scalar_lea.vmem [#allocation5], %s171
        // Predicated region
        $region33: #{tpu_custom_call.1} parent=27 // pred_check
          %p173 = pneg %p69
        $region34: #{tpu_custom_call.1} parent=27 // pred_check_branch
          %175 = sbr.rel (%p173) target = $region36
        $region35: #{tpu_custom_call.1} parent=27 // pred_region
          %176 = dma.done %s169, 128
        $region36: #{tpu_custom_call.1} parent=27 // pred_fallthru
          _
        %s177 = sand.u32 %s30, 1
        %s178 = scalar_lea.sflag [#allocation3], %s177
        %s179 = sand.u32 %s30, 1
        %s180 = smul.addr %s179, 16
        %s181 = scalar_lea.vmem [#allocation2], %s180
        %p182 = pneg %p43
        %p183 = pneg %p40
        %s184 = sand.u32 %s56, 1
        %s185 = scalar_lea.sflag [#allocation6], %s184
        %s186 = sand.u32 %s56, 1
        %s187 = smul.addr %s186, 8
        %s188 = scalar_lea.vmem [#allocation5], %s187
        %p189 = pneg %p69
        %p190 = pneg %p66
        %p191 = pneg %p95
        %p192 = pneg %p92
        %s193 = sand.u32 %s82, 1
        %s194 = scalar_lea.sflag [#allocation4], %s193
        %s195 = sand.u32 %s82, 1
        %s196 = smul.addr %s195, 16
        %s197 = scalar_lea.vmem [#allocation7], %s196
        %v198 = vld [vmem:[%s163] sm:$0xff]
        %v199 = vld [vmem:[%s163 + $0x8] sm:$0xff]
        %v200 = vld [vmem:[%s172] sm:$0xff]
        %v201 = vadd.f32 %v198, %v200
        %v202 = vadd.f32 %v199, %v200
        %vm203 = vcmask 523264
        %204 = vst.msk [vmem:[%s197] sm:$0xff] %vm203, %v201
        %205 = vst.msk [vmem:[%s197 + $0x8] sm:$0xff] %vm203, %v202
        %s206 = sand.u32 %s82, 1
        %s207 = scalar_lea.sflag [#allocation4], %s206
        %s208 = sand.u32 %s82, 1
        %s209 = smul.addr %s208, 16
        %s210 = scalar_lea.vmem [#allocation7], %s209
        // Predicated region
        $region37: #{tpu_custom_call.1} parent=27 // pred_check
          %p211 = pneg %p92
        $region38: #{tpu_custom_call.1} parent=27 // pred_check_branch
          %213 = sbr.rel (%p211) target = $region40
        $region39: #{tpu_custom_call.1} parent=27 // pred_region
          %s215 = ssub.s32 256, 256
          %216 = vsyncadd %s207, %s215
          %s217 = smul.addr %s22, 128
          %s218 = scalar_lea.hbm %s2, %s217
          %s219 = sshll.u32 %s210, 4
          %s220 = int_to_ptr.vmem [resolvable:$true] %s219
          %225 = dma.vmem_to_hbm [thread:$0]  %s220, 256, %s218, %s207, 128, 256, 8
        $region40: #{tpu_custom_call.1} parent=27 // pred_fallthru
          _
      $region28: #{tpu_custom_call.1} parent=5 // pred_fallthru
        _
      %p226 = scmp.le.s32.totalorder 2, %s17
      // Predicated region
      $region41: #{tpu_custom_call.1} parent=5 // pred_check
        %p227 = pneg %p226
      $region42: #{tpu_custom_call.1} parent=5 // pred_check_branch
        %229 = sbr.rel (%p227) target = $region44
      $region43: #{tpu_custom_call.1} parent=5 // pred_region
        %s230 = ssub.s32 %s17, 2
        // Predicated region
        $region45: #{tpu_custom_call.1} parent=43 // pred_check
          %p231 = pneg %p98
        $region46: #{tpu_custom_call.1} parent=43 // pred_check_branch
          %233 = sbr.rel (%p231) target = $region48
        $region47: #{tpu_custom_call.1} parent=43 // pred_region
          %s234 = sand.u32 %s83, 1
          %s235 = scalar_lea.sflag [#allocation4], %s234
          %s236 = sand.u32 %s83, 1
          %s237 = smul.addr %s236, 16
          %s238 = scalar_lea.vmem [#allocation7], %s237
          %239 = dma.done %s235, 256
        $region48: #{tpu_custom_call.1} parent=43 // pred_fallthru
          _
      $region44: #{tpu_custom_call.1} parent=5 // pred_fallthru
        _
    $region6: #{tpu_custom_call.1} parent=1 // loop_footer
      %s21 = sadd.s32 1, %s17
    $region7: #{tpu_custom_call.1} parent=1 // loop_footer_branch
      %16 = sbr.rel target = $region3
    $region8: #{tpu_custom_call.1} parent=1 // loop_exit
      _
    %240 = vsyncpa [#allocation3], 1
    %s241 = scalar_lea.sflag [#allocation3], 1
    %242 = vsyncpa %s241, 1
    %243 = vsyncpa [#allocation6], 1
    %s244 = scalar_lea.sflag [#allocation6], 1
    %245 = vsyncpa %s244, 1
    %246 = vsyncpa [#allocation4], 1
    %s247 = scalar_lea.sflag [#allocation4], 1
    %248 = vsyncpa %s247, 1

</llo_original>
